<compile_context>
chip_gen: v7x
topology: tpu7x:2x2x1
jax: 0.10.0
libtpu: 0.0.40
codegen_flags: <defaults>
</compile_context>

<pallas_src>
import jax
import jax.numpy as jnp
from jax.experimental import pallas as pl
from jax.experimental.pallas import tpu as pltpu

# ------------------------- configuration ---------------------------------
STATE_DIM = {"waypoints": 10, "conventional_vehicle": 3, "ego_vehicle": 12}
ACTION_BOUND = 1.0  # stored by the module but unused in forward()

WP = STATE_DIM["waypoints"]                      # 10
VEH = STATE_DIM["conventional_vehicle"] * 2      # 6
EGO = STATE_DIM["ego_vehicle"]                   # 12
ONE = WP + VEH                                   # one_state_dim = 16
IN_DIM = 3 * ONE + EGO                           # 60

HID = 256                                        # fused encoder / fc width
AGG_COLS = 192                                   # columns that get ReLU (3 branches x 64)
OUT_PAD = 128                                    # padded action width (real = 2)


# ------------------------------ kernel -----------------------------------
def policy_kernel(state_ref,
                  enc_w_ref, enc_b_ref,
                  agg_w_ref, agg_b_ref,
                  fc_w_ref, fc_b_ref,
                  out_w_ref, out_b_ref,
                  floor_ref,
                  action_ref):
    # floor: 0.0 on the 192 encoder lanes (-> ReLU), -inf on ego lanes (-> identity)
    floor = floor_ref[...]                                     # [1, 256] f32

    x = state_ref[...].astype(jnp.bfloat16)                    # [TB, 60] bf16 MXU operand

    # stage 1: fused lane/veh/ego encoders (block-diagonal [60, 256])
    z = jnp.dot(x, enc_w_ref[...],
                preferred_element_type=jnp.float32) + enc_b_ref[...]
    z = jnp.maximum(z, floor)                                  # [TB, 256] f32

    # stage 2: fused agg (block-diag [192,192]) + identity passthrough for ego
    z = jnp.dot(z.astype(jnp.bfloat16), agg_w_ref[...],
                preferred_element_type=jnp.float32) + agg_b_ref[...]
    z = jnp.maximum(z, floor)                                  # == state_ in torch

    # stage 3: fc + ReLU
    h = jnp.maximum(
        jnp.dot(z.astype(jnp.bfloat16), fc_w_ref[...],
                preferred_element_type=jnp.float32) + fc_b_ref[...],
        0.0)                                                   # [TB, 256] f32

    # stage 4: output head (padded to 128 lanes) + tanh, stored lane-dense bf16
    a = jnp.tanh(
        jnp.dot(h.astype(jnp.bfloat16), out_w_ref[...],
                preferred_element_type=jnp.float32) + out_b_ref[...])
    action_ref[...] = a.astype(action_ref.dtype)               # [TB, 128] bf16


# ----------------------------- wrapper ------------------------------------
def _pick_batch_tile(B):
    """Fixed 256/512 batch tiles for large B (>=2 pipelined grid steps, a few MB
    of per-step VMEM); a single full-extent tile for small batches."""
    if B <= 256:
        return B
    return 256 if B <= 2048 else 512


@jax.jit
def policy_forward(state, fused):
    B = state.shape[0]
    TB = _pick_batch_tile(B)
    steps = pl.cdiv(B, TB)
    grid = (steps,)

    # Pad the batch to a tile multiple with zero rows (defined math, no NaNs);
    # the padded rows are sliced away below.
    Bp = steps * TB
    if Bp != B:
        state = jnp.pad(state, ((0, Bp - B), (0, 0)))

    weight_specs = [
        pl.BlockSpec((IN_DIM, HID), lambda i: (0, 0)),   # enc_w (bf16)
        pl.BlockSpec((1, HID), lambda i: (0, 0)),        # enc_b (f32)
        pl.BlockSpec((HID, HID), lambda i: (0, 0)),      # agg_w (bf16)
        pl.BlockSpec((1, HID), lambda i: (0, 0)),        # agg_b (f32)
        pl.BlockSpec((HID, HID), lambda i: (0, 0)),      # fc_w (bf16)
        pl.BlockSpec((1, HID), lambda i: (0, 0)),        # fc_b (f32)
        pl.BlockSpec((HID, OUT_PAD), lambda i: (0, 0)),  # out_w (bf16, zero-padded)
        pl.BlockSpec((1, OUT_PAD), lambda i: (0, 0)),    # out_b (f32, zero-padded)
        pl.BlockSpec((1, HID), lambda i: (0, 0)),        # relu floor row (f32)
    ]

    flops = 2 * Bp * (IN_DIM * HID + HID * HID + HID * HID + HID * OUT_PAD)
    weight_bytes = (2 * (IN_DIM * HID + 2 * HID * HID + HID * OUT_PAD)   # bf16 weights
                    + 4 * (3 * HID + OUT_PAD + HID))                     # f32 biases + floor
    bytes_accessed = 4 * Bp * IN_DIM + 2 * Bp * OUT_PAD + weight_bytes

    out = pl.pallas_call(
        policy_kernel,
        out_shape=jax.ShapeDtypeStruct((Bp, OUT_PAD), jnp.bfloat16),
        grid=grid,
        in_specs=[pl.BlockSpec((TB, IN_DIM), lambda i: (i, 0))] + weight_specs,
        out_specs=pl.BlockSpec((TB, OUT_PAD), lambda i: (i, 0)),
        compiler_params=pltpu.CompilerParams(
            dimension_semantics=("parallel",)),   # v7x: split batch tiles over both TCs
        cost_estimate=pl.CostEstimate(
            flops=flops, transcendentals=Bp * OUT_PAD, bytes_accessed=bytes_accessed),
    )(state,
      fused["enc_w"], fused["enc_b"],
      fused["agg_w"], fused["agg_b"],
      fused["fc_w"], fused["fc_b"],
      fused["out_w"], fused["out_b"],
      fused["relu_floor"])
    return out[:B, :2].astype(jnp.float32)


# ------------------------- parameter init ---------------------------------
def _linear_init(key, fan_in, fan_out):
    """PyTorch nn.Linear default: U(-1/sqrt(fan_in), 1/sqrt(fan_in)).
    Weight stored already transposed to [in, out]; bias shaped [1, out]."""
    kw, kb = jax.random.split(key)
    bound = 1.0 / jnp.sqrt(jnp.float32(fan_in))
    w = jax.random.uniform(kw, (fan_in, fan_out), jnp.float32, -bound, bound)
    b = jax.random.uniform(kb, (1, fan_out), jnp.float32, -bound, bound)
    return w, b


def init_params(key):
    """PyTorch-layout parameters (used by the pure-JAX reference)."""
    keys = jax.random.split(key, 14)
    lane_w, lane_b, veh_w, veh_b, agg_w, agg_b = [], [], [], [], [], []
    for e in range(3):
        lw, lb = _linear_init(keys[3 * e + 0], WP, 32)
        vw, vb = _linear_init(keys[3 * e + 1], VEH, 32)
        aw, ab = _linear_init(keys[3 * e + 2], 64, 64)
        lane_w.append(lw); lane_b.append(lb)
        veh_w.append(vw); veh_b.append(vb)
        agg_w.append(aw); agg_b.append(ab)
    ego_w, ego_b = _linear_init(keys[9], EGO, 64)
    fc_w, fc_b = _linear_init(keys[10], 256, 256)
    out_w, out_b = _linear_init(keys[11], 256, 2)
    return {
        "lane_w": jnp.stack(lane_w), "lane_b": jnp.stack(lane_b),   # [3,WP,32], [3,1,32]
        "veh_w": jnp.stack(veh_w), "veh_b": jnp.stack(veh_b),       # [3,VEH,32]
        "agg_w": jnp.stack(agg_w), "agg_b": jnp.stack(agg_b),       # [3,64,64]
        "ego_w": ego_w, "ego_b": ego_b,                             # [EGO,64]
        "fc_w": fc_w, "fc_b": fc_b,                                 # [256,256]
        "out_w": out_w, "out_b": out_b,                             # [256,2]
    }


def pack_params(p):
    """Offline repack into fused block-diagonal weights consumed by the kernel.

    enc output column layout: [lane0|veh0 | lane1|veh1 | lane2|veh2 | ego]
    (== torch.cat((lane_enc, veh_enc)) per branch, then branches, then ego),
    so the original fc_w needs NO row permutation.  Weight matrices are cast
    to bf16 (MXU-native); biases and the ReLU floor stay f32.
    """
    enc_w = jnp.zeros((IN_DIM, HID), jnp.float32)
    enc_b = jnp.zeros((1, HID), jnp.float32)
    agg_w = jnp.zeros((HID, HID), jnp.float32)
    agg_b = jnp.zeros((1, HID), jnp.float32)
    for e in range(3):
        r0, c0 = e * ONE, e * 64
        enc_w = enc_w.at[r0:r0 + WP, c0:c0 + 32].set(p["lane_w"][e])
        enc_w = enc_w.at[r0 + WP:r0 + ONE, c0 + 32:c0 + 64].set(p["veh_w"][e])
        enc_b = enc_b.at[0, c0:c0 + 32].set(p["lane_b"][e, 0])
        enc_b = enc_b.at[0, c0 + 32:c0 + 64].set(p["veh_b"][e, 0])
        agg_w = agg_w.at[c0:c0 + 64, c0:c0 + 64].set(p["agg_w"][e])
        agg_b = agg_b.at[0, c0:c0 + 64].set(p["agg_b"][e, 0])
    # ego encoder block (linear, no activation) + identity passthrough in agg
    enc_w = enc_w.at[3 * ONE:, AGG_COLS:].set(p["ego_w"])
    enc_b = enc_b.at[0, AGG_COLS:].set(p["ego_b"][0])
    agg_w = agg_w.at[AGG_COLS:, AGG_COLS:].set(jnp.eye(64, dtype=jnp.float32))

    out_w = jnp.zeros((HID, OUT_PAD), jnp.float32).at[:, :2].set(p["out_w"])
    out_b = jnp.zeros((1, OUT_PAD), jnp.float32).at[:, :2].set(p["out_b"])

    # ReLU floor: 0.0 on the 192 encoder/agg lanes, -inf on the 64 ego lanes.
    floor = jnp.concatenate(
        [jnp.zeros((1, AGG_COLS), jnp.float32),
         jnp.full((1, HID - AGG_COLS), -jnp.inf, jnp.float32)], axis=1)

    return {
        "enc_w": enc_w.astype(jnp.bfloat16), "enc_b": enc_b,        # [60,256] bf16, [1,256] f32
        "agg_w": agg_w.astype(jnp.bfloat16), "agg_b": agg_b,        # [256,256] bf16, [1,256] f32
        "fc_w": p["fc_w"].astype(jnp.bfloat16), "fc_b": p["fc_b"],  # [256,256] bf16, [1,256] f32
        "out_w": out_w.astype(jnp.bfloat16), "out_b": out_b,        # [256,128] bf16, [1,128] f32
        "relu_floor": floor,                                        # [1,256] f32
    }


# --------------------------- pure-JAX reference ----------------------------
def reference_forward(state, p):
    encs = []
    for e in range(3):
        seg = state[:, e * ONE:(e + 1) * ONE]
        lane, veh = seg[:, :WP], seg[:, WP:]
        lane_enc = jax.nn.relu(lane @ p["lane_w"][e] + p["lane_b"][e])
        veh_enc = jax.nn.relu(veh @ p["veh_w"][e] + p["veh_b"][e])
        cat = jnp.concatenate([lane_enc, veh_enc], axis=1)
        encs.append(jax.nn.relu(cat @ p["agg_w"][e] + p["agg_b"][e]))
    ego_enc = state[:, 3 * ONE:] @ p["ego_w"] + p["ego_b"]   # no activation
    encs.append(ego_enc)
    state_cat = jnp.concatenate(encs, axis=1)
    hidden = jax.nn.relu(state_cat @ p["fc_w"] + p["fc_b"])
    return jnp.tanh(hidden @ p["out_w"] + p["out_b"])


# ------------------------------- main --------------------------------------
if __name__ == "__main__":
    key = jax.random.PRNGKey(0)
    k_params, k_state = jax.random.split(key)

    params = init_params(k_params)
    fused = pack_params(params)

    B = 8
    state = jax.random.normal(k_state, (B, IN_DIM), jnp.float32)

    action = policy_forward(state, fused)
    action = jax.block_until_ready(action)

    ref = reference_forward(state, params)
    assert action.shape == (B, 2)
    max_err = jnp.max(jnp.abs(action - ref))
    # bf16 MXU operands + bf16 output store vs. the f32 reference: errors are
    # a few 1e-3 for this net; 3e-2 still catches any structural/packing bug.
    assert jnp.allclose(action, ref, atol=3e-2, rtol=3e-2), (
        f"mismatch: max abs err {max_err}")

    print("KERNEL_OK")
</pallas_src>

<mosaic_0001>
module attributes {stable_mosaic.version = 11 : i64} {
  func.func @policy_kernel(%arg0: i32, %arg1: memref<8x60xf32, #tpu.memory_space<vmem>>, %arg2: memref<60x256xbf16, #tpu.memory_space<vmem>>, %arg3: memref<1x256xf32, #tpu.memory_space<vmem>>, %arg4: memref<256x256xbf16, #tpu.memory_space<vmem>>, %arg5: memref<1x256xf32, #tpu.memory_space<vmem>>, %arg6: memref<256x256xbf16, #tpu.memory_space<vmem>>, %arg7: memref<1x256xf32, #tpu.memory_space<vmem>>, %arg8: memref<256x128xbf16, #tpu.memory_space<vmem>>, %arg9: memref<1x128xf32, #tpu.memory_space<vmem>>, %arg10: memref<1x256xf32, #tpu.memory_space<vmem>>, %arg11: memref<8x128xbf16, #tpu.memory_space<vmem>>) attributes {dimension_semantics = [#tpu.dimension_semantics<parallel>], iteration_bounds = array<i64: 1>, scalar_prefetch = 0 : i64, scratch_operands = 0 : i64, tpu.core_type = #tpu.core_type<tc>, window_params = [{transform_indices = @transform_0, window_bounds = array<i64: 8, 60>}, {pipeline_mode = #tpu.pipeline_mode<synchronous>, transform_indices = @transform_1, window_bounds = array<i64: 60, 256>}, {pipeline_mode = #tpu.pipeline_mode<synchronous>, transform_indices = @transform_2, window_bounds = array<i64: 1, 256>}, {pipeline_mode = #tpu.pipeline_mode<synchronous>, transform_indices = @transform_3, window_bounds = array<i64: 256, 256>}, {pipeline_mode = #tpu.pipeline_mode<synchronous>, transform_indices = @transform_4, window_bounds = array<i64: 1, 256>}, {pipeline_mode = #tpu.pipeline_mode<synchronous>, transform_indices = @transform_5, window_bounds = array<i64: 256, 256>}, {pipeline_mode = #tpu.pipeline_mode<synchronous>, transform_indices = @transform_6, window_bounds = array<i64: 1, 256>}, {pipeline_mode = #tpu.pipeline_mode<synchronous>, transform_indices = @transform_7, window_bounds = array<i64: 256, 128>}, {pipeline_mode = #tpu.pipeline_mode<synchronous>, transform_indices = @transform_8, window_bounds = array<i64: 1, 128>}, {pipeline_mode = #tpu.pipeline_mode<synchronous>, transform_indices = @transform_9, window_bounds = array<i64: 1, 256>}, {transform_indices = @transform_10, window_bounds = array<i64: 8, 128>}]} {
    %c0 = arith.constant 0 : index
    %c0_0 = arith.constant 0 : index
    %0 = vector.load %arg10[%c0, %c0_0] : memref<1x256xf32, #tpu.memory_space<vmem>>, vector<1x256xf32>
    %c0_1 = arith.constant 0 : index
    %c0_2 = arith.constant 0 : index
    %1 = vector.load %arg1[%c0_1, %c0_2] : memref<8x60xf32, #tpu.memory_space<vmem>>, vector<8x60xf32>
    %2 = arith.truncf %1 : vector<8x60xf32> to vector<8x60xbf16>
    %c0_3 = arith.constant 0 : index
    %c0_4 = arith.constant 0 : index
    %3 = vector.load %arg2[%c0_3, %c0_4] : memref<60x256xbf16, #tpu.memory_space<vmem>>, vector<60x256xbf16>
    %cst = arith.constant dense<0.000000e+00> : vector<8x256xf32>
    %4 = tpu.matmul %2, %3, %cst {dimension_numbers = #tpu.dot_dimension_numbers<[1], [0], [0], [1], [0, 0, 1, 1], [], []>} : vector<8x60xbf16>, vector<60x256xbf16>, vector<8x256xf32> -> vector<8x256xf32>
    %c0_5 = arith.constant 0 : index
    %c0_6 = arith.constant 0 : index
    %5 = vector.load %arg3[%c0_5, %c0_6] : memref<1x256xf32, #tpu.memory_space<vmem>>, vector<1x256xf32>
    %6 = vector.broadcast %5 : vector<1x256xf32> to vector<8x256xf32>
    %7 = arith.addf %4, %6 : vector<8x256xf32>
    %8 = vector.broadcast %0 : vector<1x256xf32> to vector<8x256xf32>
    %9 = arith.maximumf %7, %8 : vector<8x256xf32>
    %10 = arith.truncf %9 : vector<8x256xf32> to vector<8x256xbf16>
    %c0_7 = arith.constant 0 : index
    %c0_8 = arith.constant 0 : index
    %11 = vector.load %arg4[%c0_7, %c0_8] : memref<256x256xbf16, #tpu.memory_space<vmem>>, vector<256x256xbf16>
    %cst_9 = arith.constant dense<0.000000e+00> : vector<8x256xf32>
    %12 = tpu.matmul %10, %11, %cst_9 {dimension_numbers = #tpu.dot_dimension_numbers<[1], [0], [0], [1], [0, 0, 1, 1], [], []>} : vector<8x256xbf16>, vector<256x256xbf16>, vector<8x256xf32> -> vector<8x256xf32>
    %c0_10 = arith.constant 0 : index
    %c0_11 = arith.constant 0 : index
    %13 = vector.load %arg5[%c0_10, %c0_11] : memref<1x256xf32, #tpu.memory_space<vmem>>, vector<1x256xf32>
    %14 = vector.broadcast %13 : vector<1x256xf32> to vector<8x256xf32>
    %15 = arith.addf %12, %14 : vector<8x256xf32>
    %16 = vector.broadcast %0 : vector<1x256xf32> to vector<8x256xf32>
    %17 = arith.maximumf %15, %16 : vector<8x256xf32>
    %18 = arith.truncf %17 : vector<8x256xf32> to vector<8x256xbf16>
    %c0_12 = arith.constant 0 : index
    %c0_13 = arith.constant 0 : index
    %19 = vector.load %arg6[%c0_12, %c0_13] : memref<256x256xbf16, #tpu.memory_space<vmem>>, vector<256x256xbf16>
    %cst_14 = arith.constant dense<0.000000e+00> : vector<8x256xf32>
    %20 = tpu.matmul %18, %19, %cst_14 {dimension_numbers = #tpu.dot_dimension_numbers<[1], [0], [0], [1], [0, 0, 1, 1], [], []>} : vector<8x256xbf16>, vector<256x256xbf16>, vector<8x256xf32> -> vector<8x256xf32>
    %c0_15 = arith.constant 0 : index
    %c0_16 = arith.constant 0 : index
    %21 = vector.load %arg7[%c0_15, %c0_16] : memref<1x256xf32, #tpu.memory_space<vmem>>, vector<1x256xf32>
    %22 = vector.broadcast %21 : vector<1x256xf32> to vector<8x256xf32>
    %23 = arith.addf %20, %22 : vector<8x256xf32>
    %cst_17 = arith.constant 0.000000e+00 : f32
    %24 = vector.broadcast %cst_17 : f32 to vector<8x256xf32>
    %25 = arith.maximumf %23, %24 : vector<8x256xf32>
    %26 = arith.truncf %25 : vector<8x256xf32> to vector<8x256xbf16>
    %c0_18 = arith.constant 0 : index
    %c0_19 = arith.constant 0 : index
    %27 = vector.load %arg8[%c0_18, %c0_19] : memref<256x128xbf16, #tpu.memory_space<vmem>>, vector<256x128xbf16>
    %cst_20 = arith.constant dense<0.000000e+00> : vector<8x128xf32>
    %28 = tpu.matmul %26, %27, %cst_20 {dimension_numbers = #tpu.dot_dimension_numbers<[1], [0], [0], [1], [0, 0, 1, 1], [], []>} : vector<8x256xbf16>, vector<256x128xbf16>, vector<8x128xf32> -> vector<8x128xf32>
    %c0_21 = arith.constant 0 : index
    %c0_22 = arith.constant 0 : index
    %29 = vector.load %arg9[%c0_21, %c0_22] : memref<1x128xf32, #tpu.memory_space<vmem>>, vector<1x128xf32>
    %30 = vector.broadcast %29 : vector<1x128xf32> to vector<8x128xf32>
    %31 = arith.addf %28, %30 : vector<8x128xf32>
    %32 = math.tanh %31 : vector<8x128xf32>
    %33 = arith.truncf %32 : vector<8x128xf32> to vector<8x128xbf16>
    %c0_23 = arith.constant 0 : index
    %c0_24 = arith.constant 0 : index
    %34 = vector.load %arg11[%c0_23, %c0_24] : memref<8x128xbf16, #tpu.memory_space<vmem>>, vector<8x128xbf16>
    tpu.vector_store %arg11[%c0_23, %c0_24], %33 {strides = array<i32>} : memref<8x128xbf16, #tpu.memory_space<vmem>>, vector<8x128xbf16>,
    return
  }
  func.func @transform_0(%arg0: i32) -> (i32, i32) {
    %c0_i32 = arith.constant 0 : i32
    %c0_i32_0 = arith.constant 0 : i32
    return %arg0, %c0_i32 : i32, i32
  }
  func.func @transform_1(%arg0: i32) -> (i32, i32) {
    %c0_i32 = arith.constant 0 : i32
    %c0_i32_0 = arith.constant 0 : i32
    %c0_i32_1 = arith.constant 0 : i32
    return %c0_i32, %c0_i32_0 : i32, i32
  }
  func.func @transform_2(%arg0: i32) -> (i32, i32) {
    %c0_i32 = arith.constant 0 : i32
    %c0_i32_0 = arith.constant 0 : i32
    %c0_i32_1 = arith.constant 0 : i32
    return %c0_i32, %c0_i32_0 : i32, i32
  }
  func.func @transform_3(%arg0: i32) -> (i32, i32) {
    %c0_i32 = arith.constant 0 : i32
    %c0_i32_0 = arith.constant 0 : i32
    %c0_i32_1 = arith.constant 0 : i32
    return %c0_i32, %c0_i32_0 : i32, i32
  }
  func.func @transform_4(%arg0: i32) -> (i32, i32) {
    %c0_i32 = arith.constant 0 : i32
    %c0_i32_0 = arith.constant 0 : i32
    %c0_i32_1 = arith.constant 0 : i32
    return %c0_i32, %c0_i32_0 : i32, i32
  }
  func.func @transform_5(%arg0: i32) -> (i32, i32) {
    %c0_i32 = arith.constant 0 : i32
    %c0_i32_0 = arith.constant 0 : i32
    %c0_i32_1 = arith.constant 0 : i32
    return %c0_i32, %c0_i32_0 : i32, i32
  }
  func.func @transform_6(%arg0: i32) -> (i32, i32) {
    %c0_i32 = arith.constant 0 : i32
    %c0_i32_0 = arith.constant 0 : i32
    %c0_i32_1 = arith.constant 0 : i32
    return %c0_i32, %c0_i32_0 : i32, i32
  }
  func.func @transform_7(%arg0: i32) -> (i32, i32) {
    %c0_i32 = arith.constant 0 : i32
    %c0_i32_0 = arith.constant 0 : i32
    %c0_i32_1 = arith.constant 0 : i32
    return %c0_i32, %c0_i32_0 : i32, i32
  }
  func.func @transform_8(%arg0: i32) -> (i32, i32) {
    %c0_i32 = arith.constant 0 : i32
    %c0_i32_0 = arith.constant 0 : i32
    %c0_i32_1 = arith.constant 0 : i32
    return %c0_i32, %c0_i32_0 : i32, i32
  }
  func.func @transform_9(%arg0: i32) -> (i32, i32) {
    %c0_i32 = arith.constant 0 : i32
    %c0_i32_0 = arith.constant 0 : i32
    %c0_i32_1 = arith.constant 0 : i32
    return %c0_i32, %c0_i32_0 : i32, i32
  }
  func.func @transform_10(%arg0: i32) -> (i32, i32) {
    %c0_i32 = arith.constant 0 : i32
    %c0_i32_0 = arith.constant 0 : i32
    return %arg0, %c0_i32 : i32, i32
  }
}

</mosaic_0001>

<llo_original>
// kernel: policy_forward.1
$region0: #{policy_forward.1}
  #allocation0 [shape = 'u32[]', space=smem, size = 0x4, offset = 0x4, fixed_abs, tag = 'smem constant byte address 0x4 - core index']
  #allocation1 [shape = 'u32[144,128]{1,0:T(1,128)}', space=vmem, size = 0x12000, scoped, tag = 'internal scratch']
  %s0 = inlined_call_operand.hbm [shape: f32[8,60], index: 0, kind: input, shape index: {}]
  %s1 = inlined_call_operand.hbm [shape: bf16[60,256], index: 1, kind: input, shape index: {}]
  %s2 = inlined_call_operand.vmem [shape: f32[1,256], index: 2, kind: input, shape index: {}]
  %s3 = inlined_call_operand.hbm [shape: bf16[256,256], index: 3, kind: input, shape index: {}]
  %s4 = inlined_call_operand.hbm [shape: f32[1,256], index: 4, kind: input, shape index: {}]
  %s5 = inlined_call_operand.hbm [shape: bf16[256,256], index: 5, kind: input, shape index: {}]
  %s6 = inlined_call_operand.vmem [shape: f32[1,256], index: 6, kind: input, shape index: {}]
  %s7 = inlined_call_operand.hbm [shape: bf16[256,128], index: 7, kind: input, shape index: {}]
  %s8 = inlined_call_operand.vmem [shape: f32[1,128], index: 8, kind: input, shape index: {}]
  %s9 = inlined_call_operand.vmem [shape: f32[1,256], index: 9, kind: input, shape index: {}]
  %s10 = inlined_call_operand.vmem [shape: bf16[8,128], index: 10, kind: output, shape index: {}]
  %s11 = sld [smem:[#allocation0]]
  $region74: #{policy_forward.1} parent=0
    _
  %s13 = ssub.s32 1, %s11
  %s14 = scalar_select 0, %s13, %s11
  $region1: #{policy_forward.1} parent=0
    #allocation2 [shape = 'u8[4096]{0}', space=vmem, size = 0x1000, scoped, tag = 'input window, operand 0, single buffered']
    #allocation3 [shape = 's32[1]{0}', space=sflag, size = 0x4, scoped, tag = 'scoped memory for policy_forward.1']
    #allocation4 [shape = 'u8[32768]{0}', space=vmem, size = 0x8000, scoped, tag = 'input window, operand 1, single buffered']
    #allocation5 [shape = 's32[1]{0}', space=sflag, size = 0x4, scoped, tag = 'scoped memory for policy_forward.1']
    #allocation6 [shape = 'u8[131072]{0}', space=vmem, size = 0x20000, scoped, tag = 'input window, operand 3, single buffered']
    #allocation7 [shape = 'u8[1024]{0}', space=vmem, size = 0x400, scoped, tag = 'input window, operand 4, single buffered']
    #allocation8 [shape = 's32[1]{0}', space=sflag, size = 0x4, scoped, tag = 'scoped memory for policy_forward.1']
    #allocation9 [shape = 'u8[131072]{0}', space=vmem, size = 0x20000, scoped, tag = 'input window, operand 5, single buffered']
    #allocation10 [shape = 'u8[65536]{0}', space=vmem, size = 0x10000, scoped, tag = 'input window, operand 7, single buffered']
    #allocation11 [shape = 's32[1]{0}', space=sflag, size = 0x4, scoped, tag = 'scoped memory for policy_forward.1']
    %15 = vsyncpa [#allocation3], 0
    %16 = vsyncpa [#allocation5], 0
    %17 = vsyncpa [#allocation8], 0
    %18 = vsyncpa [#allocation11], 0
    // Predicated region
    $region2: #{policy_forward.1} parent=1 // pred_check
      _
    $region3: #{policy_forward.1} parent=1 // pred_check_branch
      %20 = sbr.rel (0) target = $region5
    $region4: #{policy_forward.1} parent=1 // pred_region
      %s22 = ssub.s32 128, 128
      %23 = vsyncadd [#allocation3], %s22
      %s25 = sshll.u32 [#allocation2], 4
      %s26 = int_to_ptr.vmem [resolvable:$true] %s25
      %28 = dma.hbm_to_vmem [thread:$0]  %s0, 128, %s26, [#allocation3]
    $region5: #{policy_forward.1} parent=1 // pred_fallthru
      _
    // Predicated region
    $region6: #{policy_forward.1} parent=1 // pred_check
      _
    $region7: #{policy_forward.1} parent=1 // pred_check_branch
      %30 = sbr.rel (0) target = $region9
    $region8: #{policy_forward.1} parent=1 // pred_region
      %s32 = ssub.s32 1024, 1024
      %33 = vsyncadd [#allocation5], %s32
      %s34 = sshll.u32 [#allocation4], 4
      %s35 = int_to_ptr.vmem [resolvable:$true] %s34
      %40 = dma.hbm_to_vmem [thread:$0]  %s1, 1024, %s35, [#allocation5], 128, 128, 8
    $region9: #{policy_forward.1} parent=1 // pred_fallthru
      _
    // Predicated region
    $region10: #{policy_forward.1} parent=1 // pred_check
      _
    $region11: #{policy_forward.1} parent=1 // pred_check_branch
      %42 = sbr.rel (0) target = $region13
    $region12: #{policy_forward.1} parent=1 // pred_region
      _
    $region13: #{policy_forward.1} parent=1 // pred_fallthru
      _
    // Predicated region
    $region14: #{policy_forward.1} parent=1 // pred_check
      _
    $region15: #{policy_forward.1} parent=1 // pred_check_branch
      %44 = sbr.rel (0) target = $region17
    $region16: #{policy_forward.1} parent=1 // pred_region
      %s46 = ssub.s32 4096, 4096
      %47 = vsyncadd [#allocation5], %s46
      %s48 = sshll.u32 [#allocation6], 4
      %s49 = int_to_ptr.vmem [resolvable:$true] %s48
      %54 = dma.hbm_to_vmem [thread:$0]  %s3, 4096, %s49, [#allocation5], 128, 128, 8
    $region17: #{policy_forward.1} parent=1 // pred_fallthru
      _
    // Predicated region
    $region18: #{policy_forward.1} parent=1 // pred_check
      _
    $region19: #{policy_forward.1} parent=1 // pred_check_branch
      %56 = sbr.rel (0) target = $region21
    $region20: #{policy_forward.1} parent=1 // pred_region
      %s58 = ssub.s32 32, 32
      %59 = vsyncadd [#allocation8], %s58
      %s61 = sshll.u32 [#allocation7], 4
      %s62 = int_to_ptr.vmem [resolvable:$true] %s61
      %64 = dma.hbm_to_vmem [thread:$0]  %s4, 32, %s62, [#allocation8]
    $region21: #{policy_forward.1} parent=1 // pred_fallthru
      _
    // Predicated region
    $region22: #{policy_forward.1} parent=1 // pred_check
      _
    $region23: #{policy_forward.1} parent=1 // pred_check_branch
      %66 = sbr.rel (0) target = $region25
    $region24: #{policy_forward.1} parent=1 // pred_region
      %s68 = ssub.s32 4096, 4096
      %69 = vsyncadd [#allocation8], %s68
      %s70 = sshll.u32 [#allocation9], 4
      %s71 = int_to_ptr.vmem [resolvable:$true] %s70
      %76 = dma.hbm_to_vmem [thread:$0]  %s5, 4096, %s71, [#allocation8], 128, 128, 8
    $region25: #{policy_forward.1} parent=1 // pred_fallthru
      _
    // Predicated region
    $region26: #{policy_forward.1} parent=1 // pred_check
      _
    $region27: #{policy_forward.1} parent=1 // pred_check_branch
      %78 = sbr.rel (0) target = $region29
    $region28: #{policy_forward.1} parent=1 // pred_region
      _
    $region29: #{policy_forward.1} parent=1 // pred_fallthru
      _
    // Predicated region
    $region30: #{policy_forward.1} parent=1 // pred_check
      _
    $region31: #{policy_forward.1} parent=1 // pred_check_branch
      %80 = sbr.rel (0) target = $region33
    $region32: #{policy_forward.1} parent=1 // pred_region
      %s82 = ssub.s32 2048, 2048
      %83 = vsyncadd [#allocation11], %s82
      %s84 = sshll.u32 [#allocation10], 4
      %s85 = int_to_ptr.vmem [resolvable:$true] %s84
      %90 = dma.hbm_to_vmem [thread:$0]  %s7, 2048, %s85, [#allocation11], 64, 64, 4
    $region33: #{policy_forward.1} parent=1 // pred_fallthru
      _
    // Predicated region
    $region34: #{policy_forward.1} parent=1 // pred_check
      _
    $region35: #{policy_forward.1} parent=1 // pred_check_branch
      %92 = sbr.rel (0) target = $region37
    $region36: #{policy_forward.1} parent=1 // pred_region
      _
    $region37: #{policy_forward.1} parent=1 // pred_fallthru
      _
    // Predicated region
    $region38: #{policy_forward.1} parent=1 // pred_check
      _
    $region39: #{policy_forward.1} parent=1 // pred_check_branch
      %94 = sbr.rel (0) target = $region41
    $region40: #{policy_forward.1} parent=1 // pred_region
      _
    $region41: #{policy_forward.1} parent=1 // pred_fallthru
      _
    // Predicated region
    $region42: #{policy_forward.1} parent=1 // pred_check
      _
    $region43: #{policy_forward.1} parent=1 // pred_check_branch
      %96 = sbr.rel (0) target = $region45
    $region44: #{policy_forward.1} parent=1 // pred_region
      %97 = dma.done [#allocation3], 128
    $region45: #{policy_forward.1} parent=1 // pred_fallthru
      _
    // Predicated region
    $region46: #{policy_forward.1} parent=1 // pred_check
      _
    $region47: #{policy_forward.1} parent=1 // pred_check_branch
      %99 = sbr.rel (0) target = $region49
    $region48: #{policy_forward.1} parent=1 // pred_region
      %100 = dma.done [#allocation5], 1024
    $region49: #{policy_forward.1} parent=1 // pred_fallthru
      _
    // Predicated region
    $region50: #{policy_forward.1} parent=1 // pred_check
      _
    $region51: #{policy_forward.1} parent=1 // pred_check_branch
      %102 = sbr.rel (0) target = $region53
    $region52: #{policy_forward.1} parent=1 // pred_region
      %103 = dma.done [#allocation5], 4096
    $region53: #{policy_forward.1} parent=1 // pred_fallthru
      _
    // Predicated region
    $region54: #{policy_forward.1} parent=1 // pred_check
      _
    $region55: #{policy_forward.1} parent=1 // pred_check_branch
      %105 = sbr.rel (0) target = $region57
    $region56: #{policy_forward.1} parent=1 // pred_region
      %106 = dma.done [#allocation8], 32
    $region57: #{policy_forward.1} parent=1 // pred_fallthru
      _
    // Predicated region
    $region58: #{policy_forward.1} parent=1 // pred_check
      _
    $region59: #{policy_forward.1} parent=1 // pred_check_branch
      %108 = sbr.rel (0) target = $region61
    $region60: #{policy_forward.1} parent=1 // pred_region
      %109 = dma.done [#allocation8], 4096
    $region61: #{policy_forward.1} parent=1 // pred_fallthru
      _
    // Predicated region
    $region62: #{policy_forward.1} parent=1 // pred_check
      _
    $region63: #{policy_forward.1} parent=1 // pred_check_branch
      %111 = sbr.rel (0) target = $region65
    $region64: #{policy_forward.1} parent=1 // pred_region
      %112 = dma.done [#allocation11], 2048
    $region65: #{policy_forward.1} parent=1 // pred_fallthru
      _
    %v114 = vld [vmem:[%s9] sm:$0x3]
    %v115 = vld [vmem:[#allocation2] sm:$0xff]
    %v116 = vpack.c.bf16 %v115, %v115
    %v117 = vld [vmem:[#allocation4] sm:$0xff]
    %v118 = vld [vmem:[#allocation4 + $0x8] sm:$0xff]
    %v119 = vld [vmem:[#allocation4 + $0x10] sm:$0xff]
    %v120 = vld [vmem:[#allocation4 + $0x18] sm:$0xff]
    %v121 = vld [vmem:[#allocation4 + $0x20] sm:$0xff]
    %v122 = vld [vmem:[#allocation4 + $0x28] sm:$0xff]
    %v123 = vld [vmem:[#allocation4 + $0x30] sm:$0xff]
    %v124 = vld [vmem:[#allocation4 + $0x38] sm:$0x33]
    %v125 = vld [vmem:[%s2] sm:$0x3]
    %v127 = vlaneseq
    %v128 = vshrl.u32 %v127, 7
    %v129 = vsub.s32 0, %v128
    %v130 = vrot.slane %v125, %v129
    %v131 = vlaneseq
    %v132 = vshrl.u32 %v131, 7
    %v133 = vsub.s32 1, %v132
    %v134 = vrot.slane %v125, %v133
    %v145 = vunpack.c.l.b16 %v117
    %v146 = vunpack.c.h.b16 %v117
    %v147 = vunpack.c.l.b16 %v118
    %v148 = vunpack.c.h.b16 %v118
    %v149 = vunpack.c.l.b16 %v119
    %v150 = vunpack.c.h.b16 %v119
    %v151 = vunpack.c.l.b16 %v120
    %v152 = vunpack.c.h.b16 %v120
    %v153 = vunpack.c.l.b16 %v121
    %v154 = vunpack.c.h.b16 %v121
    %v155 = vunpack.c.l.b16 %v122
    %v156 = vunpack.c.h.b16 %v122
    %v157 = vunpack.c.l.b16 %v123
    %v158 = vunpack.c.h.b16 %v123
    %v159 = vunpack.c.l.b16 %v124
    %v160 = vunpack.c.h.b16 %v124
    %v161 = vpack.c.b16 %v147, %v145
    %v162 = vpack.c.b16 %v148, %v146
    %v163 = vpack.c.b16 %v151, %v149
    %v164 = vpack.c.b16 %v152, %v150
    %v165 = vpack.c.b16 %v155, %v153
    %v166 = vpack.c.b16 %v156, %v154
    %v167 = vpack.c.b16 %v159, %v157
    %v168 = vpack.c.b16 %v160, %v158
    %vm175 = vcmask 490496
    %v177 = vsel %vm175, %v116, 0
    %vm179 = vcmask 1045504
    %v181 = vsel %vm179, %v167, 0
    %v184 = vsel %vm179, %v168, 0
    %186 = vmatprep.subr.bf16.mxu0 %v162
    %187 = vmatpush1.bf16.msra.mxu0 %v161
    %188 = vmatprep.subr.bf16.mxu0 %v164
    %189 = vmatpush1.bf16.msra.mxu0 %v163
    %190 = vmatprep.subr.bf16.mxu0 %v166
    %191 = vmatpush1.bf16.msra.mxu0 %v165
    %192 = vmatprep.subr.bf16.mxu0 %v184
    %193 = vmatpush1.bf16.msra.mxu0 %v181
    %194 = vmatprep.subr.bf16.mxu0 0
    %195 = vmatpush1.bf16.msra.mxu0 0
    %196 = vmatprep.subr.bf16.mxu0 0
    %197 = vmatpush1.bf16.msra.mxu0 0
    %198 = vmatprep.subr.bf16.mxu0 0
    %199 = vmatpush1.bf16.msra.mxu0 0
    %200 = vmatprep.subr.bf16.mxu0 0
    %201 = vmatpush1.bf16.msra.mxu0 0
    %202 = vmatprep.subr.bf16.mxu0 0
    %203 = vmatpush1.bf16.msra.mxu0 0
    %204 = vmatprep.subr.bf16.mxu0 0
    %205 = vmatpush1.bf16.msra.mxu0 0
    %206 = vmatprep.subr.bf16.mxu0 0
    %207 = vmatpush1.bf16.msra.mxu0 0
    %208 = vmatprep.subr.bf16.mxu0 0
    %209 = vmatpush1.bf16.msra.mxu0 0
    %210 = vmatprep.subr.bf16.mxu0 0
    %211 = vmatpush1.bf16.msra.mxu0 0
    %212 = vmatprep.subr.bf16.mxu0 0
    %213 = vmatpush1.bf16.msra.mxu0 0
    %214 = vmatprep.subr.bf16.mxu0 0
    %215 = vmatpush1.bf16.msra.mxu0 0
    %216 = vmatprep.subr.bf16.mxu0 0
    %217 = vmatpush1.bf16.msra.mxu0 0
    %218 = vmatprep.mubr.bf16.mxu0 0
    %219 = vmatmul.mubr.bf16.gmra.mrb[0].mxu0 %v177
    %v220 = vpop.f32.mrb[0].mxu0
    %v221 = vadd.f32 %v130, %v220
    %v222 = vpop.f32.mrb[0].mxu0
    %v223 = vadd.f32 %v134, %v222
    %v224 = vpop.f32.mrb[0].mxu0
    %v225 = vpop.f32.mrb[0].mxu0
    %226 = vdwg.mxu0
    %v228 = vlaneseq
    %v229 = vshrl.u32 %v228, 7
    %v230 = vsub.s32 0, %v229
    %v231 = vrot.slane %v114, %v230
    %v232 = vlaneseq
    %v233 = vshrl.u32 %v232, 7
    %v234 = vsub.s32 1, %v233
    %v235 = vrot.slane %v114, %v234
    %v238 = vmax.f32 %v221, %v231
    %v239 = vmax.f32 %v223, %v235
    %v240 = vpack.c.bf16 %v238, %v238
    %v241 = vpack.c.bf16 %v239, %v239
    %v242 = vld [vmem:[#allocation6] sm:$0xff]
    %v243 = vld [vmem:[#allocation6 + $0x8] sm:$0xff]
    %v244 = vld [vmem:[#allocation6 + $0x10] sm:$0xff]
    %v245 = vld [vmem:[#allocation6 + $0x18] sm:$0xff]
    %v246 = vld [vmem:[#allocation6 + $0x20] sm:$0xff]
    %v247 = vld [vmem:[#allocation6 + $0x28] sm:$0xff]
    %v248 = vld [vmem:[#allocation6 + $0x30] sm:$0xff]
    %v249 = vld [vmem:[#allocation6 + $0x38] sm:$0xff]
    %v250 = vld [vmem:[#allocation6 + $0x40] sm:$0xff]
    %v251 = vld [vmem:[#allocation6 + $0x48] sm:$0xff]
    %v252 = vld [vmem:[#allocation6 + $0x50] sm:$0xff]
    %v253 = vld [vmem:[#allocation6 + $0x58] sm:$0xff]
    %v254 = vld [vmem:[#allocation6 + $0x60] sm:$0xff]
    %v255 = vld [vmem:[#allocation6 + $0x68] sm:$0xff]
    %v256 = vld [vmem:[#allocation6 + $0x70] sm:$0xff]
    %v257 = vld [vmem:[#allocation6 + $0x78] sm:$0xff]
    %v258 = vld [vmem:[#allocation6 + $0x80] sm:$0xff]
    %v259 = vld [vmem:[#allocation6 + $0x88] sm:$0xff]
    %v260 = vld [vmem:[#allocation6 + $0x90] sm:$0xff]
    %v261 = vld [vmem:[#allocation6 + $0x98] sm:$0xff]
    %v262 = vld [vmem:[#allocation6 + $0xa0] sm:$0xff]
    %v263 = vld [vmem:[#allocation6 + $0xa8] sm:$0xff]
    %v264 = vld [vmem:[#allocation6 + $0xb0] sm:$0xff]
    %v265 = vld [vmem:[#allocation6 + $0xb8] sm:$0xff]
    %v266 = vld [vmem:[#allocation6 + $0xc0] sm:$0xff]
    %v267 = vld [vmem:[#allocation6 + $0xc8] sm:$0xff]
    %v268 = vld [vmem:[#allocation6 + $0xd0] sm:$0xff]
    %v269 = vld [vmem:[#allocation6 + $0xd8] sm:$0xff]
    %v270 = vld [vmem:[#allocation6 + $0xe0] sm:$0xff]
    %v271 = vld [vmem:[#allocation6 + $0xe8] sm:$0xff]
    %v272 = vld [vmem:[#allocation6 + $0xf0] sm:$0xff]
    %v273 = vld [vmem:[#allocation6 + $0xf8] sm:$0xff]
    %v274 = vld [vmem:[#allocation7] sm:$0x3]
    %v276 = vlaneseq
    %v277 = vshrl.u32 %v276, 7
    %v278 = vsub.s32 0, %v277
    %v279 = vrot.slane %v274, %v278
    %v280 = vlaneseq
    %v281 = vshrl.u32 %v280, 7
    %v282 = vsub.s32 1, %v281
    %v283 = vrot.slane %v274, %v282
    %v318 = vunpack.c.l.b16 %v242
    %v319 = vunpack.c.h.b16 %v242
    %v320 = vunpack.c.l.b16 %v243
    %v321 = vunpack.c.h.b16 %v243
    %v322 = vunpack.c.l.b16 %v244
    %v323 = vunpack.c.h.b16 %v244
    %v324 = vunpack.c.l.b16 %v245
    %v325 = vunpack.c.h.b16 %v245
    %v326 = vunpack.c.l.b16 %v246
    %v327 = vunpack.c.h.b16 %v246
    %v328 = vunpack.c.l.b16 %v247
    %v329 = vunpack.c.h.b16 %v247
    %v330 = vunpack.c.l.b16 %v248
    %v331 = vunpack.c.h.b16 %v248
    %v332 = vunpack.c.l.b16 %v249
    %v333 = vunpack.c.h.b16 %v249
    %v334 = vunpack.c.l.b16 %v250
    %v335 = vunpack.c.h.b16 %v250
    %v336 = vunpack.c.l.b16 %v251
    %v337 = vunpack.c.h.b16 %v251
    %v338 = vunpack.c.l.b16 %v252
    %v339 = vunpack.c.h.b16 %v252
    %v340 = vunpack.c.l.b16 %v253
    %v341 = vunpack.c.h.b16 %v253
    %v342 = vunpack.c.l.b16 %v254
    %v343 = vunpack.c.h.b16 %v254
    %v344 = vunpack.c.l.b16 %v255
    %v345 = vunpack.c.h.b16 %v255
    %v346 = vunpack.c.l.b16 %v256
    %v347 = vunpack.c.h.b16 %v256
    %v348 = vunpack.c.l.b16 %v257
    %v349 = vunpack.c.h.b16 %v257
    %v350 = vunpack.c.l.b16 %v258
    %v351 = vunpack.c.h.b16 %v258
    %v352 = vunpack.c.l.b16 %v259
    %v353 = vunpack.c.h.b16 %v259
    %v354 = vunpack.c.l.b16 %v260
    %v355 = vunpack.c.h.b16 %v260
    %v356 = vunpack.c.l.b16 %v261
    %v357 = vunpack.c.h.b16 %v261
    %v358 = vunpack.c.l.b16 %v262
    %v359 = vunpack.c.h.b16 %v262
    %v360 = vunpack.c.l.b16 %v263
    %v361 = vunpack.c.h.b16 %v263
    %v362 = vunpack.c.l.b16 %v264
    %v363 = vunpack.c.h.b16 %v264
    %v364 = vunpack.c.l.b16 %v265
    %v365 = vunpack.c.h.b16 %v265
    %v366 = vunpack.c.l.b16 %v266
    %v367 = vunpack.c.h.b16 %v266
    %v368 = vunpack.c.l.b16 %v267
    %v369 = vunpack.c.h.b16 %v267
    %v370 = vunpack.c.l.b16 %v268
    %v371 = vunpack.c.h.b16 %v268
    %v372 = vunpack.c.l.b16 %v269
    %v373 = vunpack.c.h.b16 %v269
    %v374 = vunpack.c.l.b16 %v270
    %v375 = vunpack.c.h.b16 %v270
    %v376 = vunpack.c.l.b16 %v271
    %v377 = vunpack.c.h.b16 %v271
    %v378 = vunpack.c.l.b16 %v272
    %v379 = vunpack.c.h.b16 %v272
    %v380 = vunpack.c.l.b16 %v273
    %v381 = vunpack.c.h.b16 %v273
    %v382 = vpack.c.b16 %v320, %v318
    %v383 = vpack.c.b16 %v321, %v319
    %v384 = vpack.c.b16 %v324, %v322
    %v385 = vpack.c.b16 %v325, %v323
    %v386 = vpack.c.b16 %v328, %v326
    %v387 = vpack.c.b16 %v329, %v327
    %v388 = vpack.c.b16 %v332, %v330
    %v389 = vpack.c.b16 %v333, %v331
    %v390 = vpack.c.b16 %v336, %v334
    %v391 = vpack.c.b16 %v337, %v335
    %v392 = vpack.c.b16 %v340, %v338
    %v393 = vpack.c.b16 %v341, %v339
    %v394 = vpack.c.b16 %v344, %v342
    %v395 = vpack.c.b16 %v345, %v343
    %v396 = vpack.c.b16 %v348, %v346
    %v397 = vpack.c.b16 %v349, %v347
    %v398 = vpack.c.b16 %v352, %v350
    %v399 = vpack.c.b16 %v353, %v351
    %v400 = vpack.c.b16 %v356, %v354
    %v401 = vpack.c.b16 %v357, %v355
    %v402 = vpack.c.b16 %v360, %v358
    %v403 = vpack.c.b16 %v361, %v359
    %v404 = vpack.c.b16 %v364, %v362
    %v405 = vpack.c.b16 %v365, %v363
    %v406 = vpack.c.b16 %v368, %v366
    %v407 = vpack.c.b16 %v369, %v367
    %v408 = vpack.c.b16 %v372, %v370
    %v409 = vpack.c.b16 %v373, %v371
    %v410 = vpack.c.b16 %v376, %v374
    %v411 = vpack.c.b16 %v377, %v375
    %v412 = vpack.c.b16 %v380, %v378
    %v413 = vpack.c.b16 %v381, %v379
    %446 = vmatprep.subr.bf16.mxu0 %v383
    %447 = vmatpush1.bf16.msra.mxu0 %v382
    %448 = vmatprep.subr.bf16.mxu0 %v385
    %449 = vmatpush1.bf16.msra.mxu0 %v384
    %450 = vmatprep.subr.bf16.mxu0 %v387
    %451 = vmatpush1.bf16.msra.mxu0 %v386
    %452 = vmatprep.subr.bf16.mxu0 %v389
    %453 = vmatpush1.bf16.msra.mxu0 %v388
    %454 = vmatprep.subr.bf16.mxu0 %v391
    %455 = vmatpush1.bf16.msra.mxu0 %v390
    %456 = vmatprep.subr.bf16.mxu0 %v393
    %457 = vmatpush1.bf16.msra.mxu0 %v392
    %458 = vmatprep.subr.bf16.mxu0 %v395
    %459 = vmatpush1.bf16.msra.mxu0 %v394
    %460 = vmatprep.subr.bf16.mxu0 %v397
    %461 = vmatpush1.bf16.msra.mxu0 %v396
    %462 = vmatprep.subr.bf16.mxu0 %v399
    %463 = vmatpush1.bf16.msra.mxu0 %v398
    %464 = vmatprep.subr.bf16.mxu0 %v401
    %465 = vmatpush1.bf16.msra.mxu0 %v400
    %466 = vmatprep.subr.bf16.mxu0 %v403
    %467 = vmatpush1.bf16.msra.mxu0 %v402
    %468 = vmatprep.subr.bf16.mxu0 %v405
    %469 = vmatpush1.bf16.msra.mxu0 %v404
    %470 = vmatprep.subr.bf16.mxu0 %v407
    %471 = vmatpush1.bf16.msra.mxu0 %v406
    %472 = vmatprep.subr.bf16.mxu0 %v409
    %473 = vmatpush1.bf16.msra.mxu0 %v408
    %474 = vmatprep.subr.bf16.mxu0 %v411
    %475 = vmatpush1.bf16.msra.mxu0 %v410
    %476 = vmatprep.subr.bf16.mxu0 %v413
    %477 = vmatpush1.bf16.msra.mxu0 %v412
    %478 = vmatprep.mubr.bf16.mxu0 %v241
    %479 = vmatmul.mubr.bf16.gmra.mrb[0].mxu0 %v240
    %v480 = vpop.f32.mrb[0].mxu0
    %v481 = vadd.f32 %v279, %v480
    %v482 = vpop.f32.mrb[0].mxu0
    %v483 = vadd.f32 %v283, %v482
    %v484 = vpop.f32.mrb[0].mxu0
    %v485 = vpop.f32.mrb[0].mxu0
    %486 = vdwg.mxu0
    %v487 = vmax.f32 %v481, %v231
    %v488 = vmax.f32 %v483, %v235
    %v489 = vpack.c.bf16 %v487, %v487
    %v490 = vpack.c.bf16 %v488, %v488
    %v491 = vld [vmem:[#allocation9] sm:$0xff]
    %v492 = vld [vmem:[#allocation9 + $0x8] sm:$0xff]
    %v493 = vld [vmem:[#allocation9 + $0x10] sm:$0xff]
    %v494 = vld [vmem:[#allocation9 + $0x18] sm:$0xff]
    %v495 = vld [vmem:[#allocation9 + $0x20] sm:$0xff]
    %v496 = vld [vmem:[#allocation9 + $0x28] sm:$0xff]
    %v497 = vld [vmem:[#allocation9 + $0x30] sm:$0xff]
    %v498 = vld [vmem:[#allocation9 + $0x38] sm:$0xff]
    %v499 = vld [vmem:[#allocation9 + $0x40] sm:$0xff]
    %v500 = vld [vmem:[#allocation9 + $0x48] sm:$0xff]
    %v501 = vld [vmem:[#allocation9 + $0x50] sm:$0xff]
    %v502 = vld [vmem:[#allocation9 + $0x58] sm:$0xff]
    %v503 = vld [vmem:[#allocation9 + $0x60] sm:$0xff]
    %v504 = vld [vmem:[#allocation9 + $0x68] sm:$0xff]
    %v505 = vld [vmem:[#allocation9 + $0x70] sm:$0xff]
    %v506 = vld [vmem:[#allocation9 + $0x78] sm:$0xff]
    %v507 = vld [vmem:[#allocation9 + $0x80] sm:$0xff]
    %v508 = vld [vmem:[#allocation9 + $0x88] sm:$0xff]
    %v509 = vld [vmem:[#allocation9 + $0x90] sm:$0xff]
    %v510 = vld [vmem:[#allocation9 + $0x98] sm:$0xff]
    %v511 = vld [vmem:[#allocation9 + $0xa0] sm:$0xff]
    %v512 = vld [vmem:[#allocation9 + $0xa8] sm:$0xff]
    %v513 = vld [vmem:[#allocation9 + $0xb0] sm:$0xff]
    %v514 = vld [vmem:[#allocation9 + $0xb8] sm:$0xff]
    %v515 = vld [vmem:[#allocation9 + $0xc0] sm:$0xff]
    %v516 = vld [vmem:[#allocation9 + $0xc8] sm:$0xff]
    %v517 = vld [vmem:[#allocation9 + $0xd0] sm:$0xff]
    %v518 = vld [vmem:[#allocation9 + $0xd8] sm:$0xff]
    %v519 = vld [vmem:[#allocation9 + $0xe0] sm:$0xff]
    %v520 = vld [vmem:[#allocation9 + $0xe8] sm:$0xff]
    %v521 = vld [vmem:[#allocation9 + $0xf0] sm:$0xff]
    %v522 = vld [vmem:[#allocation9 + $0xf8] sm:$0xff]
    %v523 = vld [vmem:[%s6] sm:$0x3]
    %v525 = vlaneseq
    %v526 = vshrl.u32 %v525, 7
    %v527 = vsub.s32 0, %v526
    %v528 = vrot.slane %v523, %v527
    %v529 = vlaneseq
    %v530 = vshrl.u32 %v529, 7
    %v531 = vsub.s32 1, %v530
    %v532 = vrot.slane %v523, %v531
    %v567 = vunpack.c.l.b16 %v491
    %v568 = vunpack.c.h.b16 %v491
    %v569 = vunpack.c.l.b16 %v492
    %v570 = vunpack.c.h.b16 %v492
    %v571 = vunpack.c.l.b16 %v493
    %v572 = vunpack.c.h.b16 %v493
    %v573 = vunpack.c.l.b16 %v494
    %v574 = vunpack.c.h.b16 %v494
    %v575 = vunpack.c.l.b16 %v495
    %v576 = vunpack.c.h.b16 %v495
    %v577 = vunpack.c.l.b16 %v496
    %v578 = vunpack.c.h.b16 %v496
    %v579 = vunpack.c.l.b16 %v497
    %v580 = vunpack.c.h.b16 %v497
    %v581 = vunpack.c.l.b16 %v498
    %v582 = vunpack.c.h.b16 %v498
    %v583 = vunpack.c.l.b16 %v499
    %v584 = vunpack.c.h.b16 %v499
    %v585 = vunpack.c.l.b16 %v500
    %v586 = vunpack.c.h.b16 %v500
    %v587 = vunpack.c.l.b16 %v501
    %v588 = vunpack.c.h.b16 %v501
    %v589 = vunpack.c.l.b16 %v502
    %v590 = vunpack.c.h.b16 %v502
    %v591 = vunpack.c.l.b16 %v503
    %v592 = vunpack.c.h.b16 %v503
    %v593 = vunpack.c.l.b16 %v504
    %v594 = vunpack.c.h.b16 %v504
    %v595 = vunpack.c.l.b16 %v505
    %v596 = vunpack.c.h.b16 %v505
    %v597 = vunpack.c.l.b16 %v506
    %v598 = vunpack.c.h.b16 %v506
    %v599 = vunpack.c.l.b16 %v507
    %v600 = vunpack.c.h.b16 %v507
    %v601 = vunpack.c.l.b16 %v508
    %v602 = vunpack.c.h.b16 %v508
    %v603 = vunpack.c.l.b16 %v509
    %v604 = vunpack.c.h.b16 %v509
    %v605 = vunpack.c.l.b16 %v510
    %v606 = vunpack.c.h.b16 %v510
    %v607 = vunpack.c.l.b16 %v511
    %v608 = vunpack.c.h.b16 %v511
    %v609 = vunpack.c.l.b16 %v512
    %v610 = vunpack.c.h.b16 %v512
    %v611 = vunpack.c.l.b16 %v513
    %v612 = vunpack.c.h.b16 %v513
    %v613 = vunpack.c.l.b16 %v514
    %v614 = vunpack.c.h.b16 %v514
    %v615 = vunpack.c.l.b16 %v515
    %v616 = vunpack.c.h.b16 %v515
    %v617 = vunpack.c.l.b16 %v516
    %v618 = vunpack.c.h.b16 %v516
    %v619 = vunpack.c.l.b16 %v517
    %v620 = vunpack.c.h.b16 %v517
    %v621 = vunpack.c.l.b16 %v518
    %v622 = vunpack.c.h.b16 %v518
    %v623 = vunpack.c.l.b16 %v519
    %v624 = vunpack.c.h.b16 %v519
    %v625 = vunpack.c.l.b16 %v520
    %v626 = vunpack.c.h.b16 %v520
    %v627 = vunpack.c.l.b16 %v521
    %v628 = vunpack.c.h.b16 %v521
    %v629 = vunpack.c.l.b16 %v522
    %v630 = vunpack.c.h.b16 %v522
    %v631 = vpack.c.b16 %v569, %v567
    %v632 = vpack.c.b16 %v570, %v568
    %v633 = vpack.c.b16 %v573, %v571
    %v634 = vpack.c.b16 %v574, %v572
    %v635 = vpack.c.b16 %v577, %v575
    %v636 = vpack.c.b16 %v578, %v576
    %v637 = vpack.c.b16 %v581, %v579
    %v638 = vpack.c.b16 %v582, %v580
    %v639 = vpack.c.b16 %v585, %v583
    %v640 = vpack.c.b16 %v586, %v584
    %v641 = vpack.c.b16 %v589, %v587
    %v642 = vpack.c.b16 %v590, %v588
    %v643 = vpack.c.b16 %v593, %v591
    %v644 = vpack.c.b16 %v594, %v592
    %v645 = vpack.c.b16 %v597, %v595
    %v646 = vpack.c.b16 %v598, %v596
    %v647 = vpack.c.b16 %v601, %v599
    %v648 = vpack.c.b16 %v602, %v600
    %v649 = vpack.c.b16 %v605, %v603
    %v650 = vpack.c.b16 %v606, %v604
    %v651 = vpack.c.b16 %v609, %v607
    %v652 = vpack.c.b16 %v610, %v608
    %v653 = vpack.c.b16 %v613, %v611
    %v654 = vpack.c.b16 %v614, %v612
    %v655 = vpack.c.b16 %v617, %v615
    %v656 = vpack.c.b16 %v618, %v616
    %v657 = vpack.c.b16 %v621, %v619
    %v658 = vpack.c.b16 %v622, %v620
    %v659 = vpack.c.b16 %v625, %v623
    %v660 = vpack.c.b16 %v626, %v624
    %v661 = vpack.c.b16 %v629, %v627
    %v662 = vpack.c.b16 %v630, %v628
    %695 = vmatprep.subr.bf16.mxu0 %v632
    %696 = vmatpush1.bf16.msra.mxu0 %v631
    %697 = vmatprep.subr.bf16.mxu0 %v634
    %698 = vmatpush1.bf16.msra.mxu0 %v633
    %699 = vmatprep.subr.bf16.mxu0 %v636
    %700 = vmatpush1.bf16.msra.mxu0 %v635
    %701 = vmatprep.subr.bf16.mxu0 %v638
    %702 = vmatpush1.bf16.msra.mxu0 %v637
    %703 = vmatprep.subr.bf16.mxu0 %v640
    %704 = vmatpush1.bf16.msra.mxu0 %v639
    %705 = vmatprep.subr.bf16.mxu0 %v642
    %706 = vmatpush1.bf16.msra.mxu0 %v641
    %707 = vmatprep.subr.bf16.mxu0 %v644
    %708 = vmatpush1.bf16.msra.mxu0 %v643
    %709 = vmatprep.subr.bf16.mxu0 %v646
    %710 = vmatpush1.bf16.msra.mxu0 %v645
    %711 = vmatprep.subr.bf16.mxu0 %v648
    %712 = vmatpush1.bf16.msra.mxu0 %v647
    %713 = vmatprep.subr.bf16.mxu0 %v650
    %714 = vmatpush1.bf16.msra.mxu0 %v649
    %715 = vmatprep.subr.bf16.mxu0 %v652
    %716 = vmatpush1.bf16.msra.mxu0 %v651
    %717 = vmatprep.subr.bf16.mxu0 %v654
    %718 = vmatpush1.bf16.msra.mxu0 %v653
    %719 = vmatprep.subr.bf16.mxu0 %v656
    %720 = vmatpush1.bf16.msra.mxu0 %v655
    %721 = vmatprep.subr.bf16.mxu0 %v658
    %722 = vmatpush1.bf16.msra.mxu0 %v657
    %723 = vmatprep.subr.bf16.mxu0 %v660
    %724 = vmatpush1.bf16.msra.mxu0 %v659
    %725 = vmatprep.subr.bf16.mxu0 %v662
    %726 = vmatpush1.bf16.msra.mxu0 %v661
    %727 = vmatprep.mubr.bf16.mxu0 %v490
    %728 = vmatmul.mubr.bf16.gmra.mrb[0].mxu0 %v489
    %v729 = vpop.f32.mrb[0].mxu0
    %v730 = vadd.f32 %v528, %v729
    %v731 = vpop.f32.mrb[0].mxu0
    %v732 = vadd.f32 %v532, %v731
    %v733 = vpop.f32.mrb[0].mxu0
    %v734 = vpop.f32.mrb[0].mxu0
    %735 = vdwg.mxu0
    %v736 = vmax.f32 %v730, 0.0
    %v737 = vmax.f32 %v732, 0.0
    %v738 = vpack.c.bf16 %v736, %v736
    %v739 = vpack.c.bf16 %v737, %v737
    %v740 = vld [vmem:[#allocation10] sm:$0xf]
    %v741 = vld [vmem:[#allocation10 + $0x4] sm:$0xf]
    %v742 = vld [vmem:[#allocation10 + $0x8] sm:$0xf]
    %v743 = vld [vmem:[#allocation10 + $0xc] sm:$0xf]
    %v744 = vld [vmem:[#allocation10 + $0x10] sm:$0xf]
    %v745 = vld [vmem:[#allocation10 + $0x14] sm:$0xf]
    %v746 = vld [vmem:[#allocation10 + $0x18] sm:$0xf]
    %v747 = vld [vmem:[#allocation10 + $0x1c] sm:$0xf]
    %v748 = vld [vmem:[#allocation10 + $0x20] sm:$0xf]
    %v749 = vld [vmem:[#allocation10 + $0x24] sm:$0xf]
    %v750 = vld [vmem:[#allocation10 + $0x28] sm:$0xf]
    %v751 = vld [vmem:[#allocation10 + $0x2c] sm:$0xf]
    %v752 = vld [vmem:[#allocation10 + $0x30] sm:$0xf]
    %v753 = vld [vmem:[#allocation10 + $0x34] sm:$0xf]
    %v754 = vld [vmem:[#allocation10 + $0x38] sm:$0xf]
    %v755 = vld [vmem:[#allocation10 + $0x3c] sm:$0xf]
    %v756 = vld [vmem:[#allocation10 + $0x40] sm:$0xf]
    %v757 = vld [vmem:[#allocation10 + $0x44] sm:$0xf]
    %v758 = vld [vmem:[#allocation10 + $0x48] sm:$0xf]
    %v759 = vld [vmem:[#allocation10 + $0x4c] sm:$0xf]
    %v760 = vld [vmem:[#allocation10 + $0x50] sm:$0xf]
    %v761 = vld [vmem:[#allocation10 + $0x54] sm:$0xf]
    %v762 = vld [vmem:[#allocation10 + $0x58] sm:$0xf]
    %v763 = vld [vmem:[#allocation10 + $0x5c] sm:$0xf]
    %v764 = vld [vmem:[#allocation10 + $0x60] sm:$0xf]
    %v765 = vld [vmem:[#allocation10 + $0x64] sm:$0xf]
    %v766 = vld [vmem:[#allocation10 + $0x68] sm:$0xf]
    %v767 = vld [vmem:[#allocation10 + $0x6c] sm:$0xf]
    %v768 = vld [vmem:[#allocation10 + $0x70] sm:$0xf]
    %v769 = vld [vmem:[#allocation10 + $0x74] sm:$0xf]
    %v770 = vld [vmem:[#allocation10 + $0x78] sm:$0xf]
    %v771 = vld [vmem:[#allocation10 + $0x7c] sm:$0xf]
    %v772 = vld [vmem:[%s8] sm:$0x1]
    %v774 = vlaneseq
    %v775 = vshrl.u32 %v774, 7
    %v776 = vsub.s32 0, %v775
    %v777 = vrot.slane %v772, %v776
    %v811 = vunpack.c.l.b16 %v740
    %v812 = vunpack.c.l.b16 %v741
    %v813 = vunpack.c.l.b16 %v742
    %v814 = vunpack.c.l.b16 %v743
    %v815 = vunpack.c.l.b16 %v744
    %v816 = vunpack.c.l.b16 %v745
    %v817 = vunpack.c.l.b16 %v746
    %v818 = vunpack.c.l.b16 %v747
    %v819 = vunpack.c.l.b16 %v748
    %v820 = vunpack.c.l.b16 %v749
    %v821 = vunpack.c.l.b16 %v750
    %v822 = vunpack.c.l.b16 %v751
    %v823 = vunpack.c.l.b16 %v752
    %v824 = vunpack.c.l.b16 %v753
    %v825 = vunpack.c.l.b16 %v754
    %v826 = vunpack.c.l.b16 %v755
    %v827 = vunpack.c.l.b16 %v756
    %v828 = vunpack.c.l.b16 %v757
    %v829 = vunpack.c.l.b16 %v758
    %v830 = vunpack.c.l.b16 %v759
    %v831 = vunpack.c.l.b16 %v760
    %v832 = vunpack.c.l.b16 %v761
    %v833 = vunpack.c.l.b16 %v762
    %v834 = vunpack.c.l.b16 %v763
    %v835 = vunpack.c.l.b16 %v764
    %v836 = vunpack.c.l.b16 %v765
    %v837 = vunpack.c.l.b16 %v766
    %v838 = vunpack.c.l.b16 %v767
    %v839 = vunpack.c.l.b16 %v768
    %v840 = vunpack.c.l.b16 %v769
    %v841 = vunpack.c.l.b16 %v770
    %v842 = vunpack.c.l.b16 %v771
    %v843 = vpack.c.b16 %v812, %v811
    %v844 = vpack.c.b16 %v814, %v813
    %v845 = vpack.c.b16 %v816, %v815
    %v846 = vpack.c.b16 %v818, %v817
    %v847 = vpack.c.b16 %v820, %v819
    %v848 = vpack.c.b16 %v822, %v821
    %v849 = vpack.c.b16 %v824, %v823
    %v850 = vpack.c.b16 %v826, %v825
    %v851 = vpack.c.b16 %v828, %v827
    %v852 = vpack.c.b16 %v830, %v829
    %v853 = vpack.c.b16 %v832, %v831
    %v854 = vpack.c.b16 %v834, %v833
    %v855 = vpack.c.b16 %v836, %v835
    %v856 = vpack.c.b16 %v838, %v837
    %v857 = vpack.c.b16 %v840, %v839
    %v858 = vpack.c.b16 %v842, %v841
    %875 = vmatprep.subr.bf16.mxu0 0
    %876 = vmatpush1.bf16.msra.mxu0 %v843
    %877 = vmatprep.subr.bf16.mxu0 0
    %878 = vmatpush1.bf16.msra.mxu0 %v844
    %879 = vmatprep.subr.bf16.mxu0 0
    %880 = vmatpush1.bf16.msra.mxu0 %v845
    %881 = vmatprep.subr.bf16.mxu0 0
    %882 = vmatpush1.bf16.msra.mxu0 %v846
    %883 = vmatprep.subr.bf16.mxu0 0
    %884 = vmatpush1.bf16.msra.mxu0 %v847
    %885 = vmatprep.subr.bf16.mxu0 0
    %886 = vmatpush1.bf16.msra.mxu0 %v848
    %887 = vmatprep.subr.bf16.mxu0 0
    %888 = vmatpush1.bf16.msra.mxu0 %v849
    %889 = vmatprep.subr.bf16.mxu0 0
    %890 = vmatpush1.bf16.msra.mxu0 %v850
    %891 = vmatprep.subr.bf16.mxu0 0
    %892 = vmatpush1.bf16.msra.mxu0 %v851
    %893 = vmatprep.subr.bf16.mxu0 0
    %894 = vmatpush1.bf16.msra.mxu0 %v852
    %895 = vmatprep.subr.bf16.mxu0 0
    %896 = vmatpush1.bf16.msra.mxu0 %v853
    %897 = vmatprep.subr.bf16.mxu0 0
    %898 = vmatpush1.bf16.msra.mxu0 %v854
    %899 = vmatprep.subr.bf16.mxu0 0
    %900 = vmatpush1.bf16.msra.mxu0 %v855
    %901 = vmatprep.subr.bf16.mxu0 0
    %902 = vmatpush1.bf16.msra.mxu0 %v856
    %903 = vmatprep.subr.bf16.mxu0 0
    %904 = vmatpush1.bf16.msra.mxu0 %v857
    %905 = vmatprep.subr.bf16.mxu0 0
    %906 = vmatpush1.bf16.msra.mxu0 %v858
    %907 = vmatprep.mubr.bf16.mxu0 %v739
    %908 = vmatmul.mubr.bf16.gmra.mrb[0].mxu0 %v738
    %v909 = vpop.f32.mrb[0].mxu0
    %v910 = vadd.f32 %v777, %v909
    %v911 = vpop.f32.mrb[0].mxu0
    %v912 = vpop.f32.mrb[0].mxu0
    %v913 = vpop.f32.mrb[0].mxu0
    %914 = vdwg.mxu0
    %v915 = vtanh.pop %v910
    %v916 = vpack.c.bf16 %v915, %v915
    %917 = vst [vmem:[%s10] sm:$0xf] %v916
    // Predicated region
    $region66: #{policy_forward.1} parent=1 // pred_check
      _
    $region67: #{policy_forward.1} parent=1 // pred_check_branch
      %919 = sbr.rel (0) target = $region69
    $region68: #{policy_forward.1} parent=1 // pred_region
      _
    $region69: #{policy_forward.1} parent=1 // pred_fallthru
      _
    // Predicated region
    $region70: #{policy_forward.1} parent=1 // pred_check
      _
    $region71: #{policy_forward.1} parent=1 // pred_check_branch
      %921 = sbr.rel (0) target = $region73
    $region72: #{policy_forward.1} parent=1 // pred_region
      _
    $region73: #{policy_forward.1} parent=1 // pred_fallthru
      _
    %922 = vsyncpa [#allocation3], 1
    %923 = vsyncpa [#allocation5], 1
    %924 = vsyncpa [#allocation8], 1
    %925 = vsyncpa [#allocation11], 1

</llo_original>
